<compile_context>
chip_gen: v6e
topology: v6e:2x2x1
jax: 0.10.0
libtpu: 0.0.40
codegen_flags: <defaults>
</compile_context>

<pallas_src>
import functools
import numpy as np

import jax
import jax.numpy as jnp
from jax import lax
from jax.experimental import pallas as pl
from jax.experimental.pallas import tpu as pltpu


# ---------------------------------------------------------------------------
# Bilinear 2x interpolation matrix (align_corners=False, edge clamped) — the
# same linear map PyTorch's F.interpolate(scale_factor=2, mode='bilinear') uses.
# ---------------------------------------------------------------------------
def bilinear_upsample_matrix(n: int) -> np.ndarray:
    m = np.zeros((2 * n, n), dtype=np.float32)
    for o in range(2 * n):
        src = (o + 0.5) / 2.0 - 0.5
        i0 = int(np.floor(src))
        frac = src - i0
        i0c = min(max(i0, 0), n - 1)
        i1c = min(max(i0 + 1, 0), n - 1)
        m[o, i0c] += 1.0 - frac
        m[o, i1c] += frac
    return m


# ---------------------------------------------------------------------------
# Fused kernel: upsample -> conv -> bias -> ReLU.  One grid step handles `nb`
# images folded into the M dimension of all matmuls.
# ---------------------------------------------------------------------------
def _fused_kernel(x_ref, mw_ref, ubig_ref, a_ref, b_ref, o_ref, lhs_ref, *,
                  nb, H, Ho, KH, apply_relu):
    W2C = mw_ref.shape[1]                     # 2*W*C

    # ---- phase 1: 2x column upsample, channels folded into lanes (one matmul,
    #      f32 accumulation), for all nb images at once ----
    xc = jnp.dot(x_ref[...], mw_ref[...],
                 preferred_element_type=jnp.float32)          # (nb*H, 2W*C)

    # ---- phase 2: per image, ONE matmul produces all KH conv row-windows,
    #      already row-upsampled, kh-shifted and zero row-padded (all folded
    #      into U_big).  Each window is written into the fused-K LHS at an
    #      8-aligned row / 128-aligned lane offset -> no relayouts. ----
    for n in range(nb):                                        # static, tiny
        xc_n = xc[n * H:(n + 1) * H, :].astype(ubig_ref.dtype)   # aligned slice
        blk = jnp.dot(ubig_ref[...], xc_n,
                      preferred_element_type=jnp.float32)      # (KH*Ho, 2W*C)
        for kh in range(KH):
            lhs_ref[n * Ho:(n + 1) * Ho, kh * W2C:(kh + 1) * W2C] = \
                blk[kh * Ho:(kh + 1) * Ho, :]

    # ---- phase 3: the entire conv as ONE matmul with K = KH*2W*C (KH folded
    #      into K); bias + ReLU fused into the single lane-dense output store.
    #      LHS scratch is f32; cast explicitly so the MXU sees bf16 operands. ----
    out = jnp.dot(lhs_ref[...].astype(a_ref.dtype), a_ref[...],
                  preferred_element_type=jnp.float32)          # (nb*Ho, Wo*Cout)
    out = out + b_ref[...]
    if apply_relu:
        out = jnp.maximum(out, 0.0)
    o_ref[...] = out.astype(o_ref.dtype)


# ---------------------------------------------------------------------------
# Factory: builds all constants ONCE (hoisted out of the per-call path) and
# returns the per-call forward function (jit-able).
# ---------------------------------------------------------------------------
def make_upsample_conv_layer(weight_oihw, bias, *, in_hw, stride=1, padding=0,
                             activation='relu', compute_dtype=jnp.bfloat16,
                             images_per_step=None, out_dtype=jnp.float32):
    assert activation in ('relu', None)
    H, W = in_hw
    Cout, C, KH, KW = weight_oihw.shape
    H2, W2 = 2 * H, 2 * W
    Ho = (H2 + 2 * padding - KH) // stride + 1
    Wo = (W2 + 2 * padding - KW) // stride + 1
    cdt = compute_dtype

    # ---- host-side constants (numpy), exact in bf16 (coefficients are 0/0.25/0.75/1) ----
    U_H = bilinear_upsample_matrix(H)                          # (2H, H)
    U_W = bilinear_upsample_matrix(W)                          # (2W, W)
    # Column-upsample matrix acting on the flattened (W*C) lane axis: U_W kron I_C.
    M_W = np.einsum('qw,cd->wcqd', U_W,
                    np.eye(C, dtype=np.float32)).reshape(W * C, W2 * C)
    # Row upsample + per-kh output-row window + zero ROW padding folded into one
    # matrix: U_big[kh*Ho + r, :] = U_H[r*stride + kh - pad, :]  (0 if out of range).
    U_big = np.zeros((KH * Ho, H), np.float32)
    for kh in range(KH):
        for r in range(Ho):
            p = r * stride + kh - padding
            if 0 <= p < H2:
                U_big[kh * Ho + r, :] = U_H[p, :]
    # Conv column-tap selector: S[j, q, kw] = 1 iff upsampled col j == q*stride+kw-pad
    # (kw / cin taps and zero COLUMN padding folded into the structured weight A).
    S = np.zeros((W2, Wo, KW), np.float32)
    for q in range(Wo):
        for kw in range(KW):
            j = q * stride + kw - padding
            if 0 <= j < W2:
                S[j, q, kw] = 1.0

    # ---- device-side constants (built once) ----
    w_hwio = jnp.transpose(weight_oihw, (2, 3, 1, 0)).astype(jnp.float32)  # (KH,KW,C,Cout)
    A = jnp.einsum('jqk,hkco->hjcqo', jnp.asarray(S), w_hwio)
    A_flat = A.reshape(KH * W2 * C, Wo * Cout).astype(cdt)     # K = KH*2W*C, fused
    b_row = jnp.tile(bias.astype(jnp.float32), Wo)[None, :]    # (1, Wo*Cout)
    M_W_d = jnp.asarray(M_W, dtype=cdt)
    U_big_d = jnp.asarray(U_big, dtype=cdt)

    def forward(x_nchw):
        N = x_nchw.shape[0]
        assert x_nchw.shape[1:] == (C, H, W)
        nb = N if images_per_step is None else images_per_step
        assert N % nb == 0
        # NCHW -> (N*H, W*C) "NHWC-flat" (pre-upsample-sized glue, ~KB).
        x2 = jnp.transpose(x_nchw, (0, 2, 3, 1)).reshape(N * H, W * C).astype(cdt)

        kernel = functools.partial(_fused_kernel, nb=nb, H=H, Ho=Ho, KH=KH,
                                   apply_relu=(activation == 'relu'))
        flops = 2 * N * (H * (W * C) * (W2 * C)
                         + (KH * Ho) * H * (W2 * C)
                         + Ho * (KH * W2 * C) * (Wo * Cout))
        bytes_accessed = int(
            N * H * W * C * np.dtype(cdt).itemsize
            + M_W.size * np.dtype(cdt).itemsize
            + U_big.size * np.dtype(cdt).itemsize
            + KH * W2 * C * Wo * Cout * np.dtype(cdt).itemsize
            + Wo * Cout * 4
            + N * Ho * Wo * Cout * np.dtype(out_dtype).itemsize)

        out2 = pl.pallas_call(
            kernel,
            out_shape=jax.ShapeDtypeStruct((N * Ho, Wo * Cout), out_dtype),
            grid_spec=pltpu.PrefetchScalarGridSpec(
                num_scalar_prefetch=0,
                grid=(N // nb,),
                in_specs=[
                    pl.BlockSpec((nb * H, W * C), lambda g: (g, 0)),        # x (flat)
                    pl.BlockSpec((W * C, W2 * C), lambda g: (0, 0)),        # M_W
                    pl.BlockSpec((KH * Ho, H), lambda g: (0, 0)),           # U_big
                    pl.BlockSpec((KH * W2 * C, Wo * Cout), lambda g: (0, 0)),  # A
                    pl.BlockSpec((1, Wo * Cout), lambda g: (0, 0)),         # bias row
                ],
                out_specs=pl.BlockSpec((nb * Ho, Wo * Cout), lambda g: (g, 0)),
                scratch_shapes=[
                    # fused-K conv LHS (kept f32; cast only at the dot)
                    pltpu.VMEM((nb * Ho, KH * W2 * C), jnp.float32),
                ],
            ),
            compiler_params=pltpu.CompilerParams(
                dimension_semantics=("parallel",)),
            cost_estimate=pl.CostEstimate(flops=flops, transcendentals=0,
                                          bytes_accessed=bytes_accessed),
        )(x2, M_W_d, U_big_d, A_flat, b_row)

        # (N*Ho, Wo*Cout) -> NCHW to match the PyTorch interface (post-kernel glue).
        return jnp.transpose(out2.reshape(N, Ho, Wo, Cout), (0, 3, 1, 2))

    return forward


# Convenience one-shot wrapper (builds constants + runs once).
def upsample_conv_layer(x_nchw, weight_oihw, bias, *, stride=1, padding=0,
                        activation='relu', compute_dtype=jnp.bfloat16,
                        images_per_step=None, out_dtype=jnp.float32):
    H, W = x_nchw.shape[2], x_nchw.shape[3]
    fwd = make_upsample_conv_layer(
        weight_oihw, bias, in_hw=(H, W), stride=stride, padding=padding,
        activation=activation, compute_dtype=compute_dtype,
        images_per_step=images_per_step, out_dtype=out_dtype)
    return fwd(x_nchw)


# ---------------------------------------------------------------------------
# Pure-JAX reference (same math) for validation.
# ---------------------------------------------------------------------------
def reference(x_nchw, weight_oihw, bias, *, stride, padding):
    U_H = jnp.asarray(bilinear_upsample_matrix(x_nchw.shape[2]))
    U_W = jnp.asarray(bilinear_upsample_matrix(x_nchw.shape[3]))
    up = jnp.einsum('ph,nchw,qw->ncpq', U_H, x_nchw.astype(jnp.float32), U_W)
    out = lax.conv_general_dilated(
        up, weight_oihw.astype(jnp.float32),
        window_strides=(stride, stride),
        padding=[(padding, padding), (padding, padding)],
        dimension_numbers=('NCHW', 'OIHW', 'NCHW'))
    out = out + bias.astype(jnp.float32)[None, :, None, None]
    return jnp.maximum(out, 0.0)


if __name__ == "__main__":
    # Module config: UpsampleConvLayer(4, 8, kernel_size=3, stride=1, padding=1)
    in_channels, out_channels, kernel_size, stride, padding = 4, 8, 3, 1, 1
    N, H, W = 2, 16, 16

    key = jax.random.PRNGKey(0)
    kx, kw_, kb = jax.random.split(key, 3)
    x = jax.random.normal(kx, (N, in_channels, H, W), dtype=jnp.float32)
    fan_in = in_channels * kernel_size * kernel_size
    bound = 1.0 / np.sqrt(fan_in)
    weight = jax.random.uniform(kw_, (out_channels, in_channels, kernel_size, kernel_size),
                                minval=-bound, maxval=bound, dtype=jnp.float32)
    bias = jax.random.uniform(kb, (out_channels,), minval=-bound, maxval=bound,
                              dtype=jnp.float32)

    ref = reference(x, weight, bias, stride=stride, padding=padding)

    # f32 compute path (batch folded into M): tight-tolerance math check.
    out_f32 = jax.block_until_ready(
        upsample_conv_layer(x, weight, bias, stride=stride, padding=padding,
                            activation='relu', compute_dtype=jnp.float32))
    np.testing.assert_allclose(np.asarray(out_f32), np.asarray(ref),
                               rtol=1e-4, atol=1e-4)

    # bf16 operands / f32 accumulation (the default perf config), batch folded.
    out_bf16 = jax.block_until_ready(
        upsample_conv_layer(x, weight, bias, stride=stride, padding=padding,
                            activation='relu', compute_dtype=jnp.bfloat16))
    np.testing.assert_allclose(np.asarray(out_bf16), np.asarray(ref),
                               rtol=5e-2, atol=5e-2)

    # Grid-over-batch path (images_per_step=1: what you'd pick on 2-TC v7x).
    out_grid = jax.block_until_ready(
        upsample_conv_layer(x, weight, bias, stride=stride, padding=padding,
                            activation='relu', compute_dtype=jnp.bfloat16,
                            images_per_step=1))
    np.testing.assert_allclose(np.asarray(out_grid), np.asarray(ref),
                               rtol=5e-2, atol=5e-2)

    # Hoisted usage: constants built once, per-call path is just the fused kernel.
    fwd = make_upsample_conv_layer(weight, bias, in_hw=(H, W), stride=stride,
                                   padding=padding, activation='relu',
                                   compute_dtype=jnp.bfloat16)
    out_jit = jax.block_until_ready(jax.jit(fwd)(x))
    np.testing.assert_allclose(np.asarray(out_jit), np.asarray(ref),
                               rtol=5e-2, atol=5e-2)

    print("KERNEL_OK")
</pallas_src>

<mosaic_0001>
module attributes {stable_mosaic.version = 11 : i64} {
  func.func @_fused_kernel(%arg0: i32, %arg1: memref<32x64xf32, #tpu.memory_space<vmem>>, %arg2: memref<64x128xf32, #tpu.memory_space<vmem>>, %arg3: memref<96x16xf32, #tpu.memory_space<vmem>>, %arg4: memref<384x256xf32, #tpu.memory_space<vmem>>, %arg5: memref<1x256xf32, #tpu.memory_space<vmem>>, %arg6: memref<64x256xf32, #tpu.memory_space<vmem>>, %arg7: memref<64x384xf32, #tpu.memory_space<vmem>>) attributes {dimension_semantics = [#tpu.dimension_semantics<parallel>], iteration_bounds = array<i64: 1>, scalar_prefetch = 0 : i64, scratch_operands = 1 : i64, tpu.core_type = #tpu.core_type<tc>, window_params = [{transform_indices = @transform_0, window_bounds = array<i64: 32, 64>}, {pipeline_mode = #tpu.pipeline_mode<synchronous>, transform_indices = @transform_1, window_bounds = array<i64: 64, 128>}, {pipeline_mode = #tpu.pipeline_mode<synchronous>, transform_indices = @transform_2, window_bounds = array<i64: 96, 16>}, {pipeline_mode = #tpu.pipeline_mode<synchronous>, transform_indices = @transform_3, window_bounds = array<i64: 384, 256>}, {pipeline_mode = #tpu.pipeline_mode<synchronous>, transform_indices = @transform_4, window_bounds = array<i64: 1, 256>}, {transform_indices = @transform_5, window_bounds = array<i64: 64, 256>}]} {
    %c0 = arith.constant 0 : index
    %c0_0 = arith.constant 0 : index
    %0 = vector.load %arg1[%c0, %c0_0] : memref<32x64xf32, #tpu.memory_space<vmem>>, vector<32x64xf32>
    %c0_1 = arith.constant 0 : index
    %c0_2 = arith.constant 0 : index
    %1 = vector.load %arg2[%c0_1, %c0_2] : memref<64x128xf32, #tpu.memory_space<vmem>>, vector<64x128xf32>
    %cst = arith.constant dense<0.000000e+00> : vector<32x128xf32>
    %2 = tpu.matmul %0, %1, %cst {dimension_numbers = #tpu.dot_dimension_numbers<[1], [0], [0], [1], [0, 0, 1, 1], [], []>} : vector<32x64xf32>, vector<64x128xf32>, vector<32x128xf32> -> vector<32x128xf32>
    %3 = vector.extract_strided_slice %2 {offsets = [0, 0], sizes = [16, 128], strides = [1, 1]} : vector<32x128xf32> to vector<16x128xf32>
    %c0_3 = arith.constant 0 : index
    %c0_4 = arith.constant 0 : index
    %4 = vector.load %arg3[%c0_3, %c0_4] : memref<96x16xf32, #tpu.memory_space<vmem>>, vector<96x16xf32>
    %cst_5 = arith.constant dense<0.000000e+00> : vector<96x128xf32>
    %5 = tpu.matmul %4, %3, %cst_5 {dimension_numbers = #tpu.dot_dimension_numbers<[1], [0], [0], [1], [0, 0, 1, 1], [], []>} : vector<96x16xf32>, vector<16x128xf32>, vector<96x128xf32> -> vector<96x128xf32>
    %6 = vector.extract_strided_slice %5 {offsets = [0, 0], sizes = [32, 128], strides = [1, 1]} : vector<96x128xf32> to vector<32x128xf32>
    %c0_6 = arith.constant 0 : index
    %c0_7 = arith.constant 0 : index
    %7 = vector.load %arg7[%c0_6, %c0_7] : memref<64x384xf32, #tpu.memory_space<vmem>>, vector<32x128xf32>
    tpu.vector_store %arg7[%c0_6, %c0_7], %6 {strides = array<i32>} : memref<64x384xf32, #tpu.memory_space<vmem>>, vector<32x128xf32>,
    %8 = vector.extract_strided_slice %5 {offsets = [32, 0], sizes = [32, 128], strides = [1, 1]} : vector<96x128xf32> to vector<32x128xf32>
    %c0_8 = arith.constant 0 : index
    %c128 = arith.constant 128 : index
    %9 = vector.load %arg7[%c0_8, %c128] : memref<64x384xf32, #tpu.memory_space<vmem>>, vector<32x128xf32>
    tpu.vector_store %arg7[%c0_8, %c128], %8 {strides = array<i32>} : memref<64x384xf32, #tpu.memory_space<vmem>>, vector<32x128xf32>,
    %10 = vector.extract_strided_slice %5 {offsets = [64, 0], sizes = [32, 128], strides = [1, 1]} : vector<96x128xf32> to vector<32x128xf32>
    %c0_9 = arith.constant 0 : index
    %c256 = arith.constant 256 : index
    %11 = vector.load %arg7[%c0_9, %c256] : memref<64x384xf32, #tpu.memory_space<vmem>>, vector<32x128xf32>
    tpu.vector_store %arg7[%c0_9, %c256], %10 {strides = array<i32>} : memref<64x384xf32, #tpu.memory_space<vmem>>, vector<32x128xf32>,
    %12 = vector.extract_strided_slice %2 {offsets = [16, 0], sizes = [16, 128], strides = [1, 1]} : vector<32x128xf32> to vector<16x128xf32>
    %c0_10 = arith.constant 0 : index
    %c0_11 = arith.constant 0 : index
    %13 = vector.load %arg3[%c0_10, %c0_11] : memref<96x16xf32, #tpu.memory_space<vmem>>, vector<96x16xf32>
    %cst_12 = arith.constant dense<0.000000e+00> : vector<96x128xf32>
    %14 = tpu.matmul %13, %12, %cst_12 {dimension_numbers = #tpu.dot_dimension_numbers<[1], [0], [0], [1], [0, 0, 1, 1], [], []>} : vector<96x16xf32>, vector<16x128xf32>, vector<96x128xf32> -> vector<96x128xf32>
    %15 = vector.extract_strided_slice %14 {offsets = [0, 0], sizes = [32, 128], strides = [1, 1]} : vector<96x128xf32> to vector<32x128xf32>
    %c32 = arith.constant 32 : index
    %c0_13 = arith.constant 0 : index
    %16 = vector.load %arg7[%c32, %c0_13] : memref<64x384xf32, #tpu.memory_space<vmem>>, vector<32x128xf32>
    tpu.vector_store %arg7[%c32, %c0_13], %15 {strides = array<i32>} : memref<64x384xf32, #tpu.memory_space<vmem>>, vector<32x128xf32>,
    %17 = vector.extract_strided_slice %14 {offsets = [32, 0], sizes = [32, 128], strides = [1, 1]} : vector<96x128xf32> to vector<32x128xf32>
    %c32_14 = arith.constant 32 : index
    %c128_15 = arith.constant 128 : index
    %18 = vector.load %arg7[%c32_14, %c128_15] : memref<64x384xf32, #tpu.memory_space<vmem>>, vector<32x128xf32>
    tpu.vector_store %arg7[%c32_14, %c128_15], %17 {strides = array<i32>} : memref<64x384xf32, #tpu.memory_space<vmem>>, vector<32x128xf32>,
    %19 = vector.extract_strided_slice %14 {offsets = [64, 0], sizes = [32, 128], strides = [1, 1]} : vector<96x128xf32> to vector<32x128xf32>
    %c32_16 = arith.constant 32 : index
    %c256_17 = arith.constant 256 : index
    %20 = vector.load %arg7[%c32_16, %c256_17] : memref<64x384xf32, #tpu.memory_space<vmem>>, vector<32x128xf32>
    tpu.vector_store %arg7[%c32_16, %c256_17], %19 {strides = array<i32>} : memref<64x384xf32, #tpu.memory_space<vmem>>, vector<32x128xf32>,
    %c0_18 = arith.constant 0 : index
    %c0_19 = arith.constant 0 : index
    %21 = vector.load %arg7[%c0_18, %c0_19] : memref<64x384xf32, #tpu.memory_space<vmem>>, vector<64x384xf32>
    %c0_20 = arith.constant 0 : index
    %c0_21 = arith.constant 0 : index
    %22 = vector.load %arg4[%c0_20, %c0_21] : memref<384x256xf32, #tpu.memory_space<vmem>>, vector<384x256xf32>
    %cst_22 = arith.constant dense<0.000000e+00> : vector<64x256xf32>
    %23 = tpu.matmul %21, %22, %cst_22 {dimension_numbers = #tpu.dot_dimension_numbers<[1], [0], [0], [1], [0, 0, 1, 1], [], []>} : vector<64x384xf32>, vector<384x256xf32>, vector<64x256xf32> -> vector<64x256xf32>
    %c0_23 = arith.constant 0 : index
    %c0_24 = arith.constant 0 : index
    %24 = vector.load %arg5[%c0_23, %c0_24] : memref<1x256xf32, #tpu.memory_space<vmem>>, vector<1x256xf32>
    %25 = vector.broadcast %24 : vector<1x256xf32> to vector<64x256xf32>
    %26 = arith.addf %23, %25 : vector<64x256xf32>
    %cst_25 = arith.constant 0.000000e+00 : f32
    %27 = vector.broadcast %cst_25 : f32 to vector<64x256xf32>
    %28 = arith.maximumf %26, %27 : vector<64x256xf32>
    %c0_26 = arith.constant 0 : index
    %c0_27 = arith.constant 0 : index
    %29 = vector.load %arg6[%c0_26, %c0_27] : memref<64x256xf32, #tpu.memory_space<vmem>>, vector<64x256xf32>
    tpu.vector_store %arg6[%c0_26, %c0_27], %28 {strides = array<i32>} : memref<64x256xf32, #tpu.memory_space<vmem>>, vector<64x256xf32>,
    return
  }
  func.func @transform_0(%arg0: i32) -> (i32, i32) {
    %c0_i32 = arith.constant 0 : i32
    %c0_i32_0 = arith.constant 0 : i32
    return %arg0, %c0_i32 : i32, i32
  }
  func.func @transform_1(%arg0: i32) -> (i32, i32) {
    %c0_i32 = arith.constant 0 : i32
    %c0_i32_0 = arith.constant 0 : i32
    %c0_i32_1 = arith.constant 0 : i32
    return %c0_i32, %c0_i32_0 : i32, i32
  }
  func.func @transform_2(%arg0: i32) -> (i32, i32) {
    %c0_i32 = arith.constant 0 : i32
    %c0_i32_0 = arith.constant 0 : i32
    %c0_i32_1 = arith.constant 0 : i32
    return %c0_i32, %c0_i32_0 : i32, i32
  }
  func.func @transform_3(%arg0: i32) -> (i32, i32) {
    %c0_i32 = arith.constant 0 : i32
    %c0_i32_0 = arith.constant 0 : i32
    %c0_i32_1 = arith.constant 0 : i32
    return %c0_i32, %c0_i32_0 : i32, i32
  }
  func.func @transform_4(%arg0: i32) -> (i32, i32) {
    %c0_i32 = arith.constant 0 : i32
    %c0_i32_0 = arith.constant 0 : i32
    %c0_i32_1 = arith.constant 0 : i32
    return %c0_i32, %c0_i32_0 : i32, i32
  }
  func.func @transform_5(%arg0: i32) -> (i32, i32) {
    %c0_i32 = arith.constant 0 : i32
    %c0_i32_0 = arith.constant 0 : i32
    return %arg0, %c0_i32 : i32, i32
  }
}

</mosaic_0001>

<llo_original>
// kernel: tpu_custom_call.1
$region0: #{tpu_custom_call.1}
  #allocation0 [shape = 'u32[]', space=smem, size = 0x4, offset = 0x4, fixed_abs, tag = 'smem constant byte address 0x4 - core index']
  #allocation1 [shape = 'u32[144,128]{1,0:T(1,128)}', space=vmem, size = 0x12000, scoped, tag = 'internal scratch']
  #allocation2 [shape = 'f32[64,384]{1,0:T(8,128)}', space=vmem, size = 0x18000, scoped, tag = 'scratch operand']
  %s0 = inlined_call_operand.vmem [shape: f32[32,64], index: 0, kind: input, shape index: {}]
  %s1 = inlined_call_operand.vmem [shape: f32[64,128], index: 1, kind: input, shape index: {}]
  %s2 = inlined_call_operand.vmem [shape: f32[96,16], index: 2, kind: input, shape index: {}]
  %s3 = inlined_call_operand.hbm [shape: f32[384,256], index: 3, kind: input, shape index: {}]
  %s4 = inlined_call_operand.vmem [shape: f32[1,256], index: 4, kind: input, shape index: {}]
  %s5 = inlined_call_operand.hbm [shape: f32[64,256], index: 5, kind: output, shape index: {}]
  %s6 = sld [smem:[#allocation0]]
  $region34: #{tpu_custom_call.1} parent=0
    _
  %s8 = ssub.s32 1, %s6
  %s9 = scalar_select 0, %s8, %s6
  $region1: #{tpu_custom_call.1} parent=0
    #allocation3 [shape = 'u8[393216]{0}', space=vmem, size = 0x60000, scoped, tag = 'input window, operand 3, single buffered']
    #allocation4 [shape = 's32[1]{0}', space=sflag, size = 0x4, scoped, tag = 'scoped memory for tpu_custom_call.1']
    #allocation5 [shape = 's32[1]{0}', space=sflag, size = 0x4, scoped, tag = 'scoped memory for tpu_custom_call.1']
    #allocation6 [shape = 'u8[65536]{0}', space=vmem, size = 0x10000, scoped, tag = 'output window, operand 0, single buffered']
    %10 = vsyncpa [#allocation4], 0
    %11 = vsyncpa [#allocation5], 0
    // Predicated region
    $region2: #{tpu_custom_call.1} parent=1 // pred_check
      _
    $region3: #{tpu_custom_call.1} parent=1 // pred_check_branch
      %13 = sbr.rel (0) target = $region5
    $region4: #{tpu_custom_call.1} parent=1 // pred_region
      _
    $region5: #{tpu_custom_call.1} parent=1 // pred_fallthru
      _
    // Predicated region
    $region6: #{tpu_custom_call.1} parent=1 // pred_check
      _
    $region7: #{tpu_custom_call.1} parent=1 // pred_check_branch
      %15 = sbr.rel (0) target = $region9
    $region8: #{tpu_custom_call.1} parent=1 // pred_region
      _
    $region9: #{tpu_custom_call.1} parent=1 // pred_fallthru
      _
    // Predicated region
    $region10: #{tpu_custom_call.1} parent=1 // pred_check
      _
    $region11: #{tpu_custom_call.1} parent=1 // pred_check_branch
      %17 = sbr.rel (0) target = $region13
    $region12: #{tpu_custom_call.1} parent=1 // pred_region
      _
    $region13: #{tpu_custom_call.1} parent=1 // pred_fallthru
      _
    // Predicated region
    $region14: #{tpu_custom_call.1} parent=1 // pred_check
      _
    $region15: #{tpu_custom_call.1} parent=1 // pred_check_branch
      %19 = sbr.rel (0) target = $region17
    $region16: #{tpu_custom_call.1} parent=1 // pred_region
      %s21 = ssub.s32 12288, 12288
      %22 = vsyncadd [#allocation4], %s21
      %s23 = sshll.u32 [#allocation3], 4
      %s24 = int_to_ptr.vmem [resolvable:$true] %s23
      %29 = dma.hbm_to_vmem [thread:$0]  %s3, 12288, %s24, [#allocation4], 256, 256, 16
    $region17: #{tpu_custom_call.1} parent=1 // pred_fallthru
      _
    // Predicated region
    $region18: #{tpu_custom_call.1} parent=1 // pred_check
      _
    $region19: #{tpu_custom_call.1} parent=1 // pred_check_branch
      %31 = sbr.rel (0) target = $region21
    $region20: #{tpu_custom_call.1} parent=1 // pred_region
      _
    $region21: #{tpu_custom_call.1} parent=1 // pred_fallthru
      _
    // Predicated region
    $region22: #{tpu_custom_call.1} parent=1 // pred_check
      _
    $region23: #{tpu_custom_call.1} parent=1 // pred_check_branch
      %33 = sbr.rel (0) target = $region25
    $region24: #{tpu_custom_call.1} parent=1 // pred_region
      %34 = dma.done [#allocation4], 12288
    $region25: #{tpu_custom_call.1} parent=1 // pred_fallthru
      _
    %v35 = vld [vmem:[%s0] sm:$0xff]
    %v36 = vld [vmem:[%s0 + $0x8] sm:$0xff]
    %v37 = vld [vmem:[%s0 + $0x10] sm:$0xff]
    %v38 = vld [vmem:[%s0 + $0x18] sm:$0xff]
    %v39 = vld [vmem:[%s1] sm:$0xff]
    %v40 = vld [vmem:[%s1 + $0x8] sm:$0xff]
    %v41 = vld [vmem:[%s1 + $0x10] sm:$0xff]
    %v42 = vld [vmem:[%s1 + $0x18] sm:$0xff]
    %v43 = vld [vmem:[%s1 + $0x20] sm:$0xff]
    %v44 = vld [vmem:[%s1 + $0x28] sm:$0xff]
    %v45 = vld [vmem:[%s1 + $0x30] sm:$0xff]
    %v46 = vld [vmem:[%s1 + $0x38] sm:$0xff]
    %vm47 = vcmask 523264
    %v49 = vsel %vm47, %v35, 0
    %v52 = vsel %vm47, %v36, 0
    %v55 = vsel %vm47, %v37, 0
    %v58 = vsel %vm47, %v38, 0
    %60 = vmatprep.subr.mxu0 0.0
    %61 = vmatpush1.msra.mxu0 0.0
    %62 = vmatprep.subr.mxu0 0.0
    %63 = vmatpush1.msra.mxu0 0.0
    %64 = vmatprep.subr.mxu0 0.0
    %65 = vmatpush1.msra.mxu0 0.0
    %66 = vmatprep.subr.mxu0 0.0
    %67 = vmatpush1.msra.mxu0 0.0
    %68 = vmatprep.subr.mxu0 0.0
    %69 = vmatpush1.msra.mxu0 0.0
    %70 = vmatprep.subr.mxu0 0.0
    %71 = vmatpush1.msra.mxu0 0.0
    %72 = vmatprep.subr.mxu0 0.0
    %73 = vmatpush1.msra.mxu0 0.0
    %74 = vmatprep.subr.mxu0 0.0
    %75 = vmatpush1.msra.mxu0 0.0
    %76 = vmatprep.subr.mxu0 0.0
    %77 = vmatpush1.msra.mxu0 %v46
    %78 = vmatprep.subr.mxu0 0.0
    %79 = vmatpush1.msra.mxu0 %v45
    %80 = vmatprep.subr.mxu0 0.0
    %81 = vmatpush1.msra.mxu0 %v44
    %82 = vmatprep.subr.mxu0 0.0
    %83 = vmatpush1.msra.mxu0 %v43
    %84 = vmatprep.subr.mxu0 0.0
    %85 = vmatpush1.msra.mxu0 %v42
    %86 = vmatprep.subr.mxu0 0.0
    %87 = vmatpush1.msra.mxu0 %v41
    %88 = vmatprep.subr.mxu0 0.0
    %89 = vmatpush1.msra.mxu0 %v40
    %90 = vmatprep.subr.mxu0 0.0
    %91 = vmatpush1.msra.mxu0 %v39
    %92 = vmatprep.subr.mxu0 0.0
    %93 = vmatpush2.msra.mxu0 0.0
    %94 = vmatprep.subr.mxu0 0.0
    %95 = vmatpush2.msra.mxu0 0.0
    %96 = vmatprep.subr.mxu0 0.0
    %97 = vmatpush2.msra.mxu0 0.0
    %98 = vmatprep.subr.mxu0 0.0
    %99 = vmatpush2.msra.mxu0 0.0
    %100 = vmatprep.subr.mxu0 0.0
    %101 = vmatpush2.msra.mxu0 0.0
    %102 = vmatprep.subr.mxu0 0.0
    %103 = vmatpush2.msra.mxu0 0.0
    %104 = vmatprep.subr.mxu0 0.0
    %105 = vmatpush2.msra.mxu0 0.0
    %106 = vmatprep.subr.mxu0 0.0
    %107 = vmatpush2.msra.mxu0 0.0
    %108 = vmatprep.subr.mxu0 0.0
    %109 = vmatpush2.msra.mxu0 0.0
    %110 = vmatprep.subr.mxu0 0.0
    %111 = vmatpush2.msra.mxu0 0.0
    %112 = vmatprep.subr.mxu0 0.0
    %113 = vmatpush2.msra.mxu0 0.0
    %114 = vmatprep.subr.mxu0 0.0
    %115 = vmatpush2.msra.mxu0 0.0
    %116 = vmatprep.subr.mxu0 0.0
    %117 = vmatpush2.msra.mxu0 0.0
    %118 = vmatprep.subr.mxu0 0.0
    %119 = vmatpush2.msra.mxu0 0.0
    %120 = vmatprep.subr.mxu0 0.0
    %121 = vmatpush2.msra.mxu0 0.0
    %122 = vmatprep.subr.mxu0 0.0
    %123 = vmatpush2.msra.mxu0 0.0
    %124 = vmatprep.mubr.f32.mxu0 0.0
    %125 = vmatmul.mubr.f32.gmra.mxu0 %v49
    %v126 = vpop.f32.mrf.mxu0
    %v127 = vadd.f32 0.0, %v126
    %v128 = vpop.f32.mrf.mxu0
    %129 = vmatprep.mubr.f32.mxu0 0.0
    %130 = vmatmul.mubr.f32.gmra.mxu0 %v52
    %v131 = vpop.f32.mrf.mxu0
    %v132 = vadd.f32 0.0, %v131
    %v133 = vpop.f32.mrf.mxu0
    %134 = vmatprep.mubr.f32.mxu0 0.0
    %135 = vmatmul.mubr.f32.gmra.mxu0 %v55
    %v136 = vpop.f32.mrf.mxu0
    %v137 = vadd.f32 0.0, %v136
    %v138 = vpop.f32.mrf.mxu0
    %139 = vmatprep.mubr.f32.mxu0 0.0
    %140 = vmatmul.mubr.f32.gmra.mxu0 %v58
    %v141 = vpop.f32.mrf.mxu0
    %v142 = vadd.f32 0.0, %v141
    %v143 = vpop.f32.mrf.mxu0
    %144 = vdwg.mxu0
    %v145 = vld [vmem:[%s2] sm:$0xff]
    %v146 = vld [vmem:[%s2 + $0x8] sm:$0xff]
    %v147 = vld [vmem:[%s2 + $0x10] sm:$0xff]
    %v148 = vld [vmem:[%s2 + $0x18] sm:$0xff]
    %v149 = vld [vmem:[%s2 + $0x20] sm:$0xff]
    %v150 = vld [vmem:[%s2 + $0x28] sm:$0xff]
    %v151 = vld [vmem:[%s2 + $0x30] sm:$0xff]
    %v152 = vld [vmem:[%s2 + $0x38] sm:$0xff]
    %v153 = vld [vmem:[%s2 + $0x40] sm:$0xff]
    %v154 = vld [vmem:[%s2 + $0x48] sm:$0xff]
    %v155 = vld [vmem:[%s2 + $0x50] sm:$0xff]
    %v156 = vld [vmem:[%s2 + $0x58] sm:$0xff]
    %vm157 = vcmask 130048
    %v159 = vsel %vm157, %v145, 0
    %v162 = vsel %vm157, %v146, 0
    %v165 = vsel %vm157, %v147, 0
    %v168 = vsel %vm157, %v148, 0
    %v171 = vsel %vm157, %v149, 0
    %v174 = vsel %vm157, %v150, 0
    %v177 = vsel %vm157, %v151, 0
    %v180 = vsel %vm157, %v152, 0
    %v183 = vsel %vm157, %v153, 0
    %v186 = vsel %vm157, %v154, 0
    %v189 = vsel %vm157, %v155, 0
    %v192 = vsel %vm157, %v156, 0
    %194 = vmatprep.subr.mxu0 0.0
    %195 = vmatpush1.msra.mxu0 0.0
    %196 = vmatprep.subr.mxu0 0.0
    %197 = vmatpush1.msra.mxu0 0.0
    %198 = vmatprep.subr.mxu0 0.0
    %199 = vmatpush1.msra.mxu0 0.0
    %200 = vmatprep.subr.mxu0 0.0
    %201 = vmatpush1.msra.mxu0 0.0
    %202 = vmatprep.subr.mxu0 0.0
    %203 = vmatpush1.msra.mxu0 0.0
    %204 = vmatprep.subr.mxu0 0.0
    %205 = vmatpush1.msra.mxu0 0.0
    %206 = vmatprep.subr.mxu0 0.0
    %207 = vmatpush1.msra.mxu0 0.0
    %208 = vmatprep.subr.mxu0 0.0
    %209 = vmatpush1.msra.mxu0 0.0
    %210 = vmatprep.subr.mxu0 0.0
    %211 = vmatpush1.msra.mxu0 0.0
    %212 = vmatprep.subr.mxu0 0.0
    %213 = vmatpush1.msra.mxu0 0.0
    %214 = vmatprep.subr.mxu0 0.0
    %215 = vmatpush1.msra.mxu0 0.0
    %216 = vmatprep.subr.mxu0 0.0
    %217 = vmatpush1.msra.mxu0 0.0
    %218 = vmatprep.subr.mxu0 0.0
    %219 = vmatpush1.msra.mxu0 0.0
    %220 = vmatprep.subr.mxu0 0.0
    %221 = vmatpush1.msra.mxu0 0.0
    %222 = vmatprep.subr.mxu0 0.0
    %223 = vmatpush1.msra.mxu0 %v132
    %224 = vmatprep.subr.mxu0 0.0
    %225 = vmatpush1.msra.mxu0 %v127
    %226 = vmatprep.subr.mxu0 0.0
    %227 = vmatpush2.msra.mxu0 0.0
    %228 = vmatprep.subr.mxu0 0.0
    %229 = vmatpush2.msra.mxu0 0.0
    %230 = vmatprep.subr.mxu0 0.0
    %231 = vmatpush2.msra.mxu0 0.0
    %232 = vmatprep.subr.mxu0 0.0
    %233 = vmatpush2.msra.mxu0 0.0
    %234 = vmatprep.subr.mxu0 0.0
    %235 = vmatpush2.msra.mxu0 0.0
    %236 = vmatprep.subr.mxu0 0.0
    %237 = vmatpush2.msra.mxu0 0.0
    %238 = vmatprep.subr.mxu0 0.0
    %239 = vmatpush2.msra.mxu0 0.0
    %240 = vmatprep.subr.mxu0 0.0
    %241 = vmatpush2.msra.mxu0 0.0
    %242 = vmatprep.subr.mxu0 0.0
    %243 = vmatpush2.msra.mxu0 0.0
    %244 = vmatprep.subr.mxu0 0.0
    %245 = vmatpush2.msra.mxu0 0.0
    %246 = vmatprep.subr.mxu0 0.0
    %247 = vmatpush2.msra.mxu0 0.0
    %248 = vmatprep.subr.mxu0 0.0
    %249 = vmatpush2.msra.mxu0 0.0
    %250 = vmatprep.subr.mxu0 0.0
    %251 = vmatpush2.msra.mxu0 0.0
    %252 = vmatprep.subr.mxu0 0.0
    %253 = vmatpush2.msra.mxu0 0.0
    %254 = vmatprep.subr.mxu0 0.0
    %255 = vmatpush2.msra.mxu0 0.0
    %256 = vmatprep.subr.mxu0 0.0
    %257 = vmatpush2.msra.mxu0 0.0
    %258 = vmatprep.mubr.f32.mxu0 0.0
    %259 = vmatmul.mubr.f32.gmra.mxu0 %v159
    %v260 = vpop.f32.mrf.mxu0
    %v261 = vadd.f32 0.0, %v260
    %v262 = vpop.f32.mrf.mxu0
    %263 = vmatprep.mubr.f32.mxu0 0.0
    %264 = vmatmul.mubr.f32.gmra.mxu0 %v162
    %v265 = vpop.f32.mrf.mxu0
    %v266 = vadd.f32 0.0, %v265
    %v267 = vpop.f32.mrf.mxu0
    %268 = vmatprep.mubr.f32.mxu0 0.0
    %269 = vmatmul.mubr.f32.gmra.mxu0 %v165
    %v270 = vpop.f32.mrf.mxu0
    %v271 = vadd.f32 0.0, %v270
    %v272 = vpop.f32.mrf.mxu0
    %273 = vmatprep.mubr.f32.mxu0 0.0
    %274 = vmatmul.mubr.f32.gmra.mxu0 %v168
    %v275 = vpop.f32.mrf.mxu0
    %v276 = vadd.f32 0.0, %v275
    %v277 = vpop.f32.mrf.mxu0
    %278 = vmatprep.mubr.f32.mxu0 0.0
    %279 = vmatmul.mubr.f32.gmra.mxu0 %v171
    %v280 = vpop.f32.mrf.mxu0
    %v281 = vadd.f32 0.0, %v280
    %v282 = vpop.f32.mrf.mxu0
    %283 = vmatprep.mubr.f32.mxu0 0.0
    %284 = vmatmul.mubr.f32.gmra.mxu0 %v174
    %v285 = vpop.f32.mrf.mxu0
    %v286 = vadd.f32 0.0, %v285
    %v287 = vpop.f32.mrf.mxu0
    %288 = vmatprep.mubr.f32.mxu0 0.0
    %289 = vmatmul.mubr.f32.gmra.mxu0 %v177
    %v290 = vpop.f32.mrf.mxu0
    %v291 = vadd.f32 0.0, %v290
    %v292 = vpop.f32.mrf.mxu0
    %293 = vmatprep.mubr.f32.mxu0 0.0
    %294 = vmatmul.mubr.f32.gmra.mxu0 %v180
    %v295 = vpop.f32.mrf.mxu0
    %v296 = vadd.f32 0.0, %v295
    %v297 = vpop.f32.mrf.mxu0
    %298 = vmatprep.mubr.f32.mxu0 0.0
    %299 = vmatmul.mubr.f32.gmra.mxu0 %v183
    %v300 = vpop.f32.mrf.mxu0
    %v301 = vadd.f32 0.0, %v300
    %v302 = vpop.f32.mrf.mxu0
    %303 = vmatprep.mubr.f32.mxu0 0.0
    %304 = vmatmul.mubr.f32.gmra.mxu0 %v186
    %v305 = vpop.f32.mrf.mxu0
    %v306 = vadd.f32 0.0, %v305
    %v307 = vpop.f32.mrf.mxu0
    %308 = vmatprep.mubr.f32.mxu0 0.0
    %309 = vmatmul.mubr.f32.gmra.mxu0 %v189
    %v310 = vpop.f32.mrf.mxu0
    %v311 = vadd.f32 0.0, %v310
    %v312 = vpop.f32.mrf.mxu0
    %313 = vmatprep.mubr.f32.mxu0 0.0
    %314 = vmatmul.mubr.f32.gmra.mxu0 %v192
    %v315 = vpop.f32.mrf.mxu0
    %v316 = vadd.f32 0.0, %v315
    %v317 = vpop.f32.mrf.mxu0
    %318 = vdwg.mxu0
    %319 = vst [vmem:[#allocation2] sm:$0xff] %v261
    %320 = vst [vmem:[#allocation2 + $0x18] sm:$0xff] %v266
    %321 = vst [vmem:[#allocation2 + $0x30] sm:$0xff] %v271
    %322 = vst [vmem:[#allocation2 + $0x48] sm:$0xff] %v276
    %323 = vst [vmem:[#allocation2 + $0x8] sm:$0xff] %v281
    %324 = vst [vmem:[#allocation2 + $0x20] sm:$0xff] %v286
    %325 = vst [vmem:[#allocation2 + $0x38] sm:$0xff] %v291
    %326 = vst [vmem:[#allocation2 + $0x50] sm:$0xff] %v296
    %327 = vst [vmem:[#allocation2 + $0x10] sm:$0xff] %v301
    %328 = vst [vmem:[#allocation2 + $0x28] sm:$0xff] %v306
    %329 = vst [vmem:[#allocation2 + $0x40] sm:$0xff] %v311
    %330 = vst [vmem:[#allocation2 + $0x58] sm:$0xff] %v316
    %v331 = vld [vmem:[%s2] sm:$0xff]
    %v332 = vld [vmem:[%s2 + $0x8] sm:$0xff]
    %v333 = vld [vmem:[%s2 + $0x10] sm:$0xff]
    %v334 = vld [vmem:[%s2 + $0x18] sm:$0xff]
    %v335 = vld [vmem:[%s2 + $0x20] sm:$0xff]
    %v336 = vld [vmem:[%s2 + $0x28] sm:$0xff]
    %v337 = vld [vmem:[%s2 + $0x30] sm:$0xff]
    %v338 = vld [vmem:[%s2 + $0x38] sm:$0xff]
    %v339 = vld [vmem:[%s2 + $0x40] sm:$0xff]
    %v340 = vld [vmem:[%s2 + $0x48] sm:$0xff]
    %v341 = vld [vmem:[%s2 + $0x50] sm:$0xff]
    %v342 = vld [vmem:[%s2 + $0x58] sm:$0xff]
    %v344 = vsel %vm157, %v331, 0
    %v347 = vsel %vm157, %v332, 0
    %v350 = vsel %vm157, %v333, 0
    %v353 = vsel %vm157, %v334, 0
    %v356 = vsel %vm157, %v335, 0
    %v359 = vsel %vm157, %v336, 0
    %v362 = vsel %vm157, %v337, 0
    %v365 = vsel %vm157, %v338, 0
    %v368 = vsel %vm157, %v339, 0
    %v371 = vsel %vm157, %v340, 0
    %v374 = vsel %vm157, %v341, 0
    %v377 = vsel %vm157, %v342, 0
    %379 = vmatprep.subr.mxu0 0.0
    %380 = vmatpush1.msra.mxu0 0.0
    %381 = vmatprep.subr.mxu0 0.0
    %382 = vmatpush1.msra.mxu0 0.0
    %383 = vmatprep.subr.mxu0 0.0
    %384 = vmatpush1.msra.mxu0 0.0
    %385 = vmatprep.subr.mxu0 0.0
    %386 = vmatpush1.msra.mxu0 0.0
    %387 = vmatprep.subr.mxu0 0.0
    %388 = vmatpush1.msra.mxu0 0.0
    %389 = vmatprep.subr.mxu0 0.0
    %390 = vmatpush1.msra.mxu0 0.0
    %391 = vmatprep.subr.mxu0 0.0
    %392 = vmatpush1.msra.mxu0 0.0
    %393 = vmatprep.subr.mxu0 0.0
    %394 = vmatpush1.msra.mxu0 0.0
    %395 = vmatprep.subr.mxu0 0.0
    %396 = vmatpush1.msra.mxu0 0.0
    %397 = vmatprep.subr.mxu0 0.0
    %398 = vmatpush1.msra.mxu0 0.0
    %399 = vmatprep.subr.mxu0 0.0
    %400 = vmatpush1.msra.mxu0 0.0
    %401 = vmatprep.subr.mxu0 0.0
    %402 = vmatpush1.msra.mxu0 0.0
    %403 = vmatprep.subr.mxu0 0.0
    %404 = vmatpush1.msra.mxu0 0.0
    %405 = vmatprep.subr.mxu0 0.0
    %406 = vmatpush1.msra.mxu0 0.0
    %407 = vmatprep.subr.mxu0 0.0
    %408 = vmatpush1.msra.mxu0 %v142
    %409 = vmatprep.subr.mxu0 0.0
    %410 = vmatpush1.msra.mxu0 %v137
    %411 = vmatprep.subr.mxu0 0.0
    %412 = vmatpush2.msra.mxu0 0.0
    %413 = vmatprep.subr.mxu0 0.0
    %414 = vmatpush2.msra.mxu0 0.0
    %415 = vmatprep.subr.mxu0 0.0
    %416 = vmatpush2.msra.mxu0 0.0
    %417 = vmatprep.subr.mxu0 0.0
    %418 = vmatpush2.msra.mxu0 0.0
    %419 = vmatprep.subr.mxu0 0.0
    %420 = vmatpush2.msra.mxu0 0.0
    %421 = vmatprep.subr.mxu0 0.0
    %422 = vmatpush2.msra.mxu0 0.0
    %423 = vmatprep.subr.mxu0 0.0
    %424 = vmatpush2.msra.mxu0 0.0
    %425 = vmatprep.subr.mxu0 0.0
    %426 = vmatpush2.msra.mxu0 0.0
    %427 = vmatprep.subr.mxu0 0.0
    %428 = vmatpush2.msra.mxu0 0.0
    %429 = vmatprep.subr.mxu0 0.0
    %430 = vmatpush2.msra.mxu0 0.0
    %431 = vmatprep.subr.mxu0 0.0
    %432 = vmatpush2.msra.mxu0 0.0
    %433 = vmatprep.subr.mxu0 0.0
    %434 = vmatpush2.msra.mxu0 0.0
    %435 = vmatprep.subr.mxu0 0.0
    %436 = vmatpush2.msra.mxu0 0.0
    %437 = vmatprep.subr.mxu0 0.0
    %438 = vmatpush2.msra.mxu0 0.0
    %439 = vmatprep.subr.mxu0 0.0
    %440 = vmatpush2.msra.mxu0 0.0
    %441 = vmatprep.subr.mxu0 0.0
    %442 = vmatpush2.msra.mxu0 0.0
    %443 = vmatprep.mubr.f32.mxu0 0.0
    %444 = vmatmul.mubr.f32.gmra.mxu0 %v344
    %v445 = vpop.f32.mrf.mxu0
    %v446 = vadd.f32 0.0, %v445
    %v447 = vpop.f32.mrf.mxu0
    %448 = vmatprep.mubr.f32.mxu0 0.0
    %449 = vmatmul.mubr.f32.gmra.mxu0 %v347
    %v450 = vpop.f32.mrf.mxu0
    %v451 = vadd.f32 0.0, %v450
    %v452 = vpop.f32.mrf.mxu0
    %453 = vmatprep.mubr.f32.mxu0 0.0
    %454 = vmatmul.mubr.f32.gmra.mxu0 %v350
    %v455 = vpop.f32.mrf.mxu0
    %v456 = vadd.f32 0.0, %v455
    %v457 = vpop.f32.mrf.mxu0
    %458 = vmatprep.mubr.f32.mxu0 0.0
    %459 = vmatmul.mubr.f32.gmra.mxu0 %v353
    %v460 = vpop.f32.mrf.mxu0
    %v461 = vadd.f32 0.0, %v460
    %v462 = vpop.f32.mrf.mxu0
    %463 = vmatprep.mubr.f32.mxu0 0.0
    %464 = vmatmul.mubr.f32.gmra.mxu0 %v356
    %v465 = vpop.f32.mrf.mxu0
    %v466 = vadd.f32 0.0, %v465
    %v467 = vpop.f32.mrf.mxu0
    %468 = vmatprep.mubr.f32.mxu0 0.0
    %469 = vmatmul.mubr.f32.gmra.mxu0 %v359
    %v470 = vpop.f32.mrf.mxu0
    %v471 = vadd.f32 0.0, %v470
    %v472 = vpop.f32.mrf.mxu0
    %473 = vmatprep.mubr.f32.mxu0 0.0
    %474 = vmatmul.mubr.f32.gmra.mxu0 %v362
    %v475 = vpop.f32.mrf.mxu0
    %v476 = vadd.f32 0.0, %v475
    %v477 = vpop.f32.mrf.mxu0
    %478 = vmatprep.mubr.f32.mxu0 0.0
    %479 = vmatmul.mubr.f32.gmra.mxu0 %v365
    %v480 = vpop.f32.mrf.mxu0
    %v481 = vadd.f32 0.0, %v480
    %v482 = vpop.f32.mrf.mxu0
    %483 = vmatprep.mubr.f32.mxu0 0.0
    %484 = vmatmul.mubr.f32.gmra.mxu0 %v368
    %v485 = vpop.f32.mrf.mxu0
    %v486 = vadd.f32 0.0, %v485
    %v487 = vpop.f32.mrf.mxu0
    %488 = vmatprep.mubr.f32.mxu0 0.0
    %489 = vmatmul.mubr.f32.gmra.mxu0 %v371
    %v490 = vpop.f32.mrf.mxu0
    %v491 = vadd.f32 0.0, %v490
    %v492 = vpop.f32.mrf.mxu0
    %493 = vmatprep.mubr.f32.mxu0 0.0
    %494 = vmatmul.mubr.f32.gmra.mxu0 %v374
    %v495 = vpop.f32.mrf.mxu0
    %v496 = vadd.f32 0.0, %v495
    %v497 = vpop.f32.mrf.mxu0
    %498 = vmatprep.mubr.f32.mxu0 0.0
    %499 = vmatmul.mubr.f32.gmra.mxu0 %v377
    %v500 = vpop.f32.mrf.mxu0
    %v501 = vadd.f32 0.0, %v500
    %v502 = vpop.f32.mrf.mxu0
    %503 = vdwg.mxu0
    %504 = vst [vmem:[#allocation2 + $0x60] sm:$0xff] %v446
    %505 = vst [vmem:[#allocation2 + $0x78] sm:$0xff] %v451
    %506 = vst [vmem:[#allocation2 + $0x90] sm:$0xff] %v456
    %507 = vst [vmem:[#allocation2 + $0xa8] sm:$0xff] %v461
    %508 = vst [vmem:[#allocation2 + $0x68] sm:$0xff] %v466
    %509 = vst [vmem:[#allocation2 + $0x80] sm:$0xff] %v471
    %510 = vst [vmem:[#allocation2 + $0x98] sm:$0xff] %v476
    %511 = vst [vmem:[#allocation2 + $0xb0] sm:$0xff] %v481
    %512 = vst [vmem:[#allocation2 + $0x70] sm:$0xff] %v486
    %513 = vst [vmem:[#allocation2 + $0x88] sm:$0xff] %v491
    %514 = vst [vmem:[#allocation2 + $0xa0] sm:$0xff] %v496
    %515 = vst [vmem:[#allocation2 + $0xb8] sm:$0xff] %v501
    %v516 = vld [vmem:[#allocation2] sm:$0xff]
    %v517 = vld [vmem:[#allocation2 + $0x8] sm:$0xff]
    %v518 = vld [vmem:[#allocation2 + $0x10] sm:$0xff]
    %v519 = vld [vmem:[#allocation2 + $0x18] sm:$0xff]
    %v520 = vld [vmem:[#allocation2 + $0x20] sm:$0xff]
    %v521 = vld [vmem:[#allocation2 + $0x28] sm:$0xff]
    %v522 = vld [vmem:[#allocation2 + $0x30] sm:$0xff]
    %v523 = vld [vmem:[#allocation2 + $0x38] sm:$0xff]
    %v524 = vld [vmem:[#allocation2 + $0x40] sm:$0xff]
    %v525 = vld [vmem:[#allocation2 + $0x48] sm:$0xff]
    %v526 = vld [vmem:[#allocation2 + $0x50] sm:$0xff]
    %v527 = vld [vmem:[#allocation2 + $0x58] sm:$0xff]
    %v528 = vld [vmem:[#allocation2 + $0x60] sm:$0xff]
    %v529 = vld [vmem:[#allocation2 + $0x68] sm:$0xff]
    %v530 = vld [vmem:[#allocation2 + $0x70] sm:$0xff]
    %v531 = vld [vmem:[#allocation2 + $0x78] sm:$0xff]
    %v532 = vld [vmem:[#allocation2 + $0x80] sm:$0xff]
    %v533 = vld [vmem:[#allocation2 + $0x88] sm:$0xff]
    %v534 = vld [vmem:[#allocation2 + $0x90] sm:$0xff]
    %v535 = vld [vmem:[#allocation2 + $0x98] sm:$0xff]
    %v536 = vld [vmem:[#allocation2 + $0xa0] sm:$0xff]
    %v537 = vld [vmem:[#allocation2 + $0xa8] sm:$0xff]
    %v538 = vld [vmem:[#allocation2 + $0xb0] sm:$0xff]
    %v539 = vld [vmem:[#allocation2 + $0xb8] sm:$0xff]
    %v540 = vld [vmem:[#allocation3] sm:$0xff]
    %v541 = vld [vmem:[#allocation3 + $0x8] sm:$0xff]
    %v542 = vld [vmem:[#allocation3 + $0x10] sm:$0xff]
    %v543 = vld [vmem:[#allocation3 + $0x18] sm:$0xff]
    %v544 = vld [vmem:[#allocation3 + $0x20] sm:$0xff]
    %v545 = vld [vmem:[#allocation3 + $0x28] sm:$0xff]
    %v546 = vld [vmem:[#allocation3 + $0x30] sm:$0xff]
    %v547 = vld [vmem:[#allocation3 + $0x38] sm:$0xff]
    %v548 = vld [vmem:[#allocation3 + $0x40] sm:$0xff]
    %v549 = vld [vmem:[#allocation3 + $0x48] sm:$0xff]
    %v550 = vld [vmem:[#allocation3 + $0x50] sm:$0xff]
    %v551 = vld [vmem:[#allocation3 + $0x58] sm:$0xff]
    %v552 = vld [vmem:[#allocation3 + $0x60] sm:$0xff]
    %v553 = vld [vmem:[#allocation3 + $0x68] sm:$0xff]
    %v554 = vld [vmem:[#allocation3 + $0x70] sm:$0xff]
    %v555 = vld [vmem:[#allocation3 + $0x78] sm:$0xff]
    %v556 = vld [vmem:[#allocation3 + $0x80] sm:$0xff]
    %v557 = vld [vmem:[#allocation3 + $0x88] sm:$0xff]
    %v558 = vld [vmem:[#allocation3 + $0x90] sm:$0xff]
    %v559 = vld [vmem:[#allocation3 + $0x98] sm:$0xff]
    %v560 = vld [vmem:[#allocation3 + $0xa0] sm:$0xff]
    %v561 = vld [vmem:[#allocation3 + $0xa8] sm:$0xff]
    %v562 = vld [vmem:[#allocation3 + $0xb0] sm:$0xff]
    %v563 = vld [vmem:[#allocation3 + $0xb8] sm:$0xff]
    %v564 = vld [vmem:[#allocation3 + $0xc0] sm:$0xff]
    %v565 = vld [vmem:[#allocation3 + $0xc8] sm:$0xff]
    %v566 = vld [vmem:[#allocation3 + $0xd0] sm:$0xff]
    %v567 = vld [vmem:[#allocation3 + $0xd8] sm:$0xff]
    %v568 = vld [vmem:[#allocation3 + $0xe0] sm:$0xff]
    %v569 = vld [vmem:[#allocation3 + $0xe8] sm:$0xff]
    %v570 = vld [vmem:[#allocation3 + $0xf0] sm:$0xff]
    %v571 = vld [vmem:[#allocation3 + $0xf8] sm:$0xff]
    %v572 = vld [vmem:[#allocation3 + $0x100] sm:$0xff]
    %v573 = vld [vmem:[#allocation3 + $0x108] sm:$0xff]
    %v574 = vld [vmem:[#allocation3 + $0x110] sm:$0xff]
    %v575 = vld [vmem:[#allocation3 + $0x118] sm:$0xff]
    %v576 = vld [vmem:[#allocation3 + $0x120] sm:$0xff]
    %v577 = vld [vmem:[#allocation3 + $0x128] sm:$0xff]
    %v578 = vld [vmem:[#allocation3 + $0x130] sm:$0xff]
    %v579 = vld [vmem:[#allocation3 + $0x138] sm:$0xff]
    %v580 = vld [vmem:[#allocation3 + $0x140] sm:$0xff]
    %v581 = vld [vmem:[#allocation3 + $0x148] sm:$0xff]
    %v582 = vld [vmem:[#allocation3 + $0x150] sm:$0xff]
    %v583 = vld [vmem:[#allocation3 + $0x158] sm:$0xff]
    %v584 = vld [vmem:[#allocation3 + $0x160] sm:$0xff]
    %v585 = vld [vmem:[#allocation3 + $0x168] sm:$0xff]
    %v586 = vld [vmem:[#allocation3 + $0x170] sm:$0xff]
    %v587 = vld [vmem:[#allocation3 + $0x178] sm:$0xff]
    %v588 = vld [vmem:[#allocation3 + $0x180] sm:$0xff]
    %v589 = vld [vmem:[#allocation3 + $0x188] sm:$0xff]
    %v590 = vld [vmem:[#allocation3 + $0x190] sm:$0xff]
    %v591 = vld [vmem:[#allocation3 + $0x198] sm:$0xff]
    %v592 = vld [vmem:[#allocation3 + $0x1a0] sm:$0xff]
    %v593 = vld [vmem:[#allocation3 + $0x1a8] sm:$0xff]
    %v594 = vld [vmem:[#allocation3 + $0x1b0] sm:$0xff]
    %v595 = vld [vmem:[#allocation3 + $0x1b8] sm:$0xff]
    %v596 = vld [vmem:[#allocation3 + $0x1c0] sm:$0xff]
    %v597 = vld [vmem:[#allocation3 + $0x1c8] sm:$0xff]
    %v598 = vld [vmem:[#allocation3 + $0x1d0] sm:$0xff]
    %v599 = vld [vmem:[#allocation3 + $0x1d8] sm:$0xff]
    %v600 = vld [vmem:[#allocation3 + $0x1e0] sm:$0xff]
    %v601 = vld [vmem:[#allocation3 + $0x1e8] sm:$0xff]
    %v602 = vld [vmem:[#allocation3 + $0x1f0] sm:$0xff]
    %v603 = vld [vmem:[#allocation3 + $0x1f8] sm:$0xff]
    %v604 = vld [vmem:[#allocation3 + $0x200] sm:$0xff]
    %v605 = vld [vmem:[#allocation3 + $0x208] sm:$0xff]
    %v606 = vld [vmem:[#allocation3 + $0x210] sm:$0xff]
    %v607 = vld [vmem:[#allocation3 + $0x218] sm:$0xff]
    %v608 = vld [vmem:[#allocation3 + $0x220] sm:$0xff]
    %v609 = vld [vmem:[#allocation3 + $0x228] sm:$0xff]
    %v610 = vld [vmem:[#allocation3 + $0x230] sm:$0xff]
    %v611 = vld [vmem:[#allocation3 + $0x238] sm:$0xff]
    %v612 = vld [vmem:[#allocation3 + $0x240] sm:$0xff]
    %v613 = vld [vmem:[#allocation3 + $0x248] sm:$0xff]
    %v614 = vld [vmem:[#allocation3 + $0x250] sm:$0xff]
    %v615 = vld [vmem:[#allocation3 + $0x258] sm:$0xff]
    %v616 = vld [vmem:[#allocation3 + $0x260] sm:$0xff]
    %v617 = vld [vmem:[#allocation3 + $0x268] sm:$0xff]
    %v618 = vld [vmem:[#allocation3 + $0x270] sm:$0xff]
    %v619 = vld [vmem:[#allocation3 + $0x278] sm:$0xff]
    %v620 = vld [vmem:[#allocation3 + $0x280] sm:$0xff]
    %v621 = vld [vmem:[#allocation3 + $0x288] sm:$0xff]
    %v622 = vld [vmem:[#allocation3 + $0x290] sm:$0xff]
    %v623 = vld [vmem:[#allocation3 + $0x298] sm:$0xff]
    %v624 = vld [vmem:[#allocation3 + $0x2a0] sm:$0xff]
    %v625 = vld [vmem:[#allocation3 + $0x2a8] sm:$0xff]
    %v626 = vld [vmem:[#allocation3 + $0x2b0] sm:$0xff]
    %v627 = vld [vmem:[#allocation3 + $0x2b8] sm:$0xff]
    %v628 = vld [vmem:[#allocation3 + $0x2c0] sm:$0xff]
    %v629 = vld [vmem:[#allocation3 + $0x2c8] sm:$0xff]
    %v630 = vld [vmem:[#allocation3 + $0x2d0] sm:$0xff]
    %v631 = vld [vmem:[#allocation3 + $0x2d8] sm:$0xff]
    %v632 = vld [vmem:[#allocation3 + $0x2e0] sm:$0xff]
    %v633 = vld [vmem:[#allocation3 + $0x2e8] sm:$0xff]
    %v634 = vld [vmem:[#allocation3 + $0x2f0] sm:$0xff]
    %v635 = vld [vmem:[#allocation3 + $0x2f8] sm:$0xff]
    %v636 = vld [vmem:[%s4] sm:$0x3]
    %v638 = vlaneseq
    %v639 = vshrl.u32 %v638, 7
    %v640 = vsub.s32 0, %v639
    %v641 = vrot.slane %v636, %v640
    %v642 = vlaneseq
    %v643 = vshrl.u32 %v642, 7
    %v644 = vsub.s32 1, %v643
    %v645 = vrot.slane %v636, %v644
    %648 = vmatprep.subr.mxu0 %v571
    %649 = vmatpush1.msra.mxu0 %v570
    %650 = vmatprep.subr.mxu0 %v569
    %651 = vmatpush1.msra.mxu0 %v568
    %652 = vmatprep.subr.mxu0 %v567
    %653 = vmatpush1.msra.mxu0 %v566
    %654 = vmatprep.subr.mxu0 %v565
    %655 = vmatpush1.msra.mxu0 %v564
    %656 = vmatprep.subr.mxu0 %v563
    %657 = vmatpush1.msra.mxu0 %v562
    %658 = vmatprep.subr.mxu0 %v561
    %659 = vmatpush1.msra.mxu0 %v560
    %660 = vmatprep.subr.mxu0 %v559
    %661 = vmatpush1.msra.mxu0 %v558
    %662 = vmatprep.subr.mxu0 %v557
    %663 = vmatpush1.msra.mxu0 %v556
    %664 = vmatprep.subr.mxu0 %v555
    %665 = vmatpush1.msra.mxu0 %v554
    %666 = vmatprep.subr.mxu0 %v553
    %667 = vmatpush1.msra.mxu0 %v552
    %668 = vmatprep.subr.mxu0 %v551
    %669 = vmatpush1.msra.mxu0 %v550
    %670 = vmatprep.subr.mxu0 %v549
    %671 = vmatpush1.msra.mxu0 %v548
    %672 = vmatprep.subr.mxu0 %v547
    %673 = vmatpush1.msra.mxu0 %v546
    %674 = vmatprep.subr.mxu0 %v545
    %675 = vmatpush1.msra.mxu0 %v544
    %676 = vmatprep.subr.mxu0 %v543
    %677 = vmatpush1.msra.mxu0 %v542
    %678 = vmatprep.subr.mxu0 %v541
    %679 = vmatpush1.msra.mxu0 %v540
    %680 = vmatprep.subr.mxu0 %v603
    %681 = vmatpush2.msra.mxu0 %v602
    %682 = vmatprep.subr.mxu0 %v601
    %683 = vmatpush2.msra.mxu0 %v600
    %684 = vmatprep.subr.mxu0 %v599
    %685 = vmatpush2.msra.mxu0 %v598
    %686 = vmatprep.subr.mxu0 %v597
    %687 = vmatpush2.msra.mxu0 %v596
    %688 = vmatprep.subr.mxu0 %v595
    %689 = vmatpush2.msra.mxu0 %v594
    %690 = vmatprep.subr.mxu0 %v593
    %691 = vmatpush2.msra.mxu0 %v592
    %692 = vmatprep.subr.mxu0 %v591
    %693 = vmatpush2.msra.mxu0 %v590
    %694 = vmatprep.subr.mxu0 %v589
    %695 = vmatpush2.msra.mxu0 %v588
    %696 = vmatprep.subr.mxu0 %v587
    %697 = vmatpush2.msra.mxu0 %v586
    %698 = vmatprep.subr.mxu0 %v585
    %699 = vmatpush2.msra.mxu0 %v584
    %700 = vmatprep.subr.mxu0 %v583
    %701 = vmatpush2.msra.mxu0 %v582
    %702 = vmatprep.subr.mxu0 %v581
    %703 = vmatpush2.msra.mxu0 %v580
    %704 = vmatprep.subr.mxu0 %v579
    %705 = vmatpush2.msra.mxu0 %v578
    %706 = vmatprep.subr.mxu0 %v577
    %707 = vmatpush2.msra.mxu0 %v576
    %708 = vmatprep.subr.mxu0 %v575
    %709 = vmatpush2.msra.mxu0 %v574
    %710 = vmatprep.subr.mxu0 %v573
    %711 = vmatpush2.msra.mxu0 %v572
    %712 = vmatprep.mubr.f32.mxu0 %v517
    %713 = vmatmul.mubr.f32.gmra.mxu0 %v516
    %v714 = vpop.f32.mrf.mxu0
    %v715 = vadd.f32 %v641, %v714
    %v716 = vpop.f32.mrf.mxu0
    %v717 = vadd.f32 %v645, %v716
    %718 = vmatprep.mubr.f32.mxu0 %v520
    %719 = vmatmul.mubr.f32.gmra.mxu0 %v519
    %v720 = vpop.f32.mrf.mxu0
    %v721 = vadd.f32 %v641, %v720
    %v722 = vpop.f32.mrf.mxu0
    %v723 = vadd.f32 %v645, %v722
    %724 = vmatprep.mubr.f32.mxu0 %v523
    %725 = vmatmul.mubr.f32.gmra.mxu0 %v522
    %v726 = vpop.f32.mrf.mxu0
    %v727 = vadd.f32 %v641, %v726
    %v728 = vpop.f32.mrf.mxu0
    %v729 = vadd.f32 %v645, %v728
    %730 = vmatprep.mubr.f32.mxu0 %v526
    %731 = vmatmul.mubr.f32.gmra.mxu0 %v525
    %v732 = vpop.f32.mrf.mxu0
    %v733 = vadd.f32 %v641, %v732
    %v734 = vpop.f32.mrf.mxu0
    %v735 = vadd.f32 %v645, %v734
    %736 = vmatprep.mubr.f32.mxu0 %v529
    %737 = vmatmul.mubr.f32.gmra.mxu0 %v528
    %v738 = vpop.f32.mrf.mxu0
    %v739 = vadd.f32 %v641, %v738
    %v740 = vpop.f32.mrf.mxu0
    %v741 = vadd.f32 %v645, %v740
    %742 = vmatprep.mubr.f32.mxu0 %v532
    %743 = vmatmul.mubr.f32.gmra.mxu0 %v531
    %v744 = vpop.f32.mrf.mxu0
    %v745 = vadd.f32 %v641, %v744
    %v746 = vpop.f32.mrf.mxu0
    %v747 = vadd.f32 %v645, %v746
    %748 = vmatprep.mubr.f32.mxu0 %v535
    %749 = vmatmul.mubr.f32.gmra.mxu0 %v534
    %v750 = vpop.f32.mrf.mxu0
    %v751 = vadd.f32 %v641, %v750
    %v752 = vpop.f32.mrf.mxu0
    %v753 = vadd.f32 %v645, %v752
    %754 = vmatprep.mubr.f32.mxu0 %v538
    %755 = vmatmul.mubr.f32.gmra.mxu0 %v537
    %v756 = vpop.f32.mrf.mxu0
    %v757 = vadd.f32 %v641, %v756
    %v758 = vpop.f32.mrf.mxu0
    %v759 = vadd.f32 %v645, %v758
    %760 = vdwg.mxu0
    %761 = vmatprep.subr.mxu0 %v635
    %762 = vmatpush1.msra.mxu0 %v634
    %763 = vmatprep.subr.mxu0 %v633
    %764 = vmatpush1.msra.mxu0 %v632
    %765 = vmatprep.subr.mxu0 %v631
    %766 = vmatpush1.msra.mxu0 %v630
    %767 = vmatprep.subr.mxu0 %v629
    %768 = vmatpush1.msra.mxu0 %v628
    %769 = vmatprep.subr.mxu0 %v627
    %770 = vmatpush1.msra.mxu0 %v626
    %771 = vmatprep.subr.mxu0 %v625
    %772 = vmatpush1.msra.mxu0 %v624
    %773 = vmatprep.subr.mxu0 %v623
    %774 = vmatpush1.msra.mxu0 %v622
    %775 = vmatprep.subr.mxu0 %v621
    %776 = vmatpush1.msra.mxu0 %v620
    %777 = vmatprep.subr.mxu0 %v619
    %778 = vmatpush1.msra.mxu0 %v618
    %779 = vmatprep.subr.mxu0 %v617
    %780 = vmatpush1.msra.mxu0 %v616
    %781 = vmatprep.subr.mxu0 %v615
    %782 = vmatpush1.msra.mxu0 %v614
    %783 = vmatprep.subr.mxu0 %v613
    %784 = vmatpush1.msra.mxu0 %v612
    %785 = vmatprep.subr.mxu0 %v611
    %786 = vmatpush1.msra.mxu0 %v610
    %787 = vmatprep.subr.mxu0 %v609
    %788 = vmatpush1.msra.mxu0 %v608
    %789 = vmatprep.subr.mxu0 %v607
    %790 = vmatpush1.msra.mxu0 %v606
    %791 = vmatprep.subr.mxu0 %v605
    %792 = vmatpush1.msra.mxu0 %v604
    %793 = vmatprep.subr.mxu0 0.0
    %794 = vmatpush2.msra.mxu0 0.0
    %795 = vmatprep.subr.mxu0 0.0
    %796 = vmatpush2.msra.mxu0 0.0
    %797 = vmatprep.subr.mxu0 0.0
    %798 = vmatpush2.msra.mxu0 0.0
    %799 = vmatprep.subr.mxu0 0.0
    %800 = vmatpush2.msra.mxu0 0.0
    %801 = vmatprep.subr.mxu0 0.0
    %802 = vmatpush2.msra.mxu0 0.0
    %803 = vmatprep.subr.mxu0 0.0
    %804 = vmatpush2.msra.mxu0 0.0
    %805 = vmatprep.subr.mxu0 0.0
    %806 = vmatpush2.msra.mxu0 0.0
    %807 = vmatprep.subr.mxu0 0.0
    %808 = vmatpush2.msra.mxu0 0.0
    %809 = vmatprep.subr.mxu0 0.0
    %810 = vmatpush2.msra.mxu0 0.0
    %811 = vmatprep.subr.mxu0 0.0
    %812 = vmatpush2.msra.mxu0 0.0
    %813 = vmatprep.subr.mxu0 0.0
    %814 = vmatpush2.msra.mxu0 0.0
    %815 = vmatprep.subr.mxu0 0.0
    %816 = vmatpush2.msra.mxu0 0.0
    %817 = vmatprep.subr.mxu0 0.0
    %818 = vmatpush2.msra.mxu0 0.0
    %819 = vmatprep.subr.mxu0 0.0
    %820 = vmatpush2.msra.mxu0 0.0
    %821 = vmatprep.subr.mxu0 0.0
    %822 = vmatpush2.msra.mxu0 0.0
    %823 = vmatprep.subr.mxu0 0.0
    %824 = vmatpush2.msra.mxu0 0.0
    %825 = vmatprep.mubr.f32.mxu0 0.0
    %826 = vmatmul.mubr.f32.gmra.mxu0 %v518
    %v827 = vpop.f32.mrf.mxu0
    %v828 = vadd.f32 %v715, %v827
    %v829 = vpop.f32.mrf.mxu0
    %v830 = vadd.f32 %v717, %v829
    %831 = vmatprep.mubr.f32.mxu0 0.0
    %832 = vmatmul.mubr.f32.gmra.mxu0 %v521
    %v833 = vpop.f32.mrf.mxu0
    %v834 = vadd.f32 %v721, %v833
    %v835 = vpop.f32.mrf.mxu0
    %v836 = vadd.f32 %v723, %v835
    %837 = vmatprep.mubr.f32.mxu0 0.0
    %838 = vmatmul.mubr.f32.gmra.mxu0 %v524
    %v839 = vpop.f32.mrf.mxu0
    %v840 = vadd.f32 %v727, %v839
    %v841 = vpop.f32.mrf.mxu0
    %v842 = vadd.f32 %v729, %v841
    %843 = vmatprep.mubr.f32.mxu0 0.0
    %844 = vmatmul.mubr.f32.gmra.mxu0 %v527
    %v845 = vpop.f32.mrf.mxu0
    %v846 = vadd.f32 %v733, %v845
    %v847 = vpop.f32.mrf.mxu0
    %v848 = vadd.f32 %v735, %v847
    %849 = vmatprep.mubr.f32.mxu0 0.0
    %850 = vmatmul.mubr.f32.gmra.mxu0 %v530
    %v851 = vpop.f32.mrf.mxu0
    %v852 = vadd.f32 %v739, %v851
    %v853 = vpop.f32.mrf.mxu0
    %v854 = vadd.f32 %v741, %v853
    %855 = vmatprep.mubr.f32.mxu0 0.0
    %856 = vmatmul.mubr.f32.gmra.mxu0 %v533
    %v857 = vpop.f32.mrf.mxu0
    %v858 = vadd.f32 %v745, %v857
    %v859 = vpop.f32.mrf.mxu0
    %v860 = vadd.f32 %v747, %v859
    %861 = vmatprep.mubr.f32.mxu0 0.0
    %862 = vmatmul.mubr.f32.gmra.mxu0 %v536
    %v863 = vpop.f32.mrf.mxu0
    %v864 = vadd.f32 %v751, %v863
    %v865 = vpop.f32.mrf.mxu0
    %v866 = vadd.f32 %v753, %v865
    %867 = vmatprep.mubr.f32.mxu0 0.0
    %868 = vmatmul.mubr.f32.gmra.mxu0 %v539
    %v869 = vpop.f32.mrf.mxu0
    %v870 = vadd.f32 %v757, %v869
    %v871 = vpop.f32.mrf.mxu0
    %v872 = vadd.f32 %v759, %v871
    %873 = vdwg.mxu0
    %v874 = vmax.f32 %v828, 0.0
    %v875 = vmax.f32 %v830, 0.0
    %v876 = vmax.f32 %v834, 0.0
    %v877 = vmax.f32 %v836, 0.0
    %v878 = vmax.f32 %v840, 0.0
    %v879 = vmax.f32 %v842, 0.0
    %v880 = vmax.f32 %v846, 0.0
    %v881 = vmax.f32 %v848, 0.0
    %v882 = vmax.f32 %v852, 0.0
    %v883 = vmax.f32 %v854, 0.0
    %v884 = vmax.f32 %v858, 0.0
    %v885 = vmax.f32 %v860, 0.0
    %v886 = vmax.f32 %v864, 0.0
    %v887 = vmax.f32 %v866, 0.0
    %v888 = vmax.f32 %v870, 0.0
    %v889 = vmax.f32 %v872, 0.0
    %890 = vst [vmem:[#allocation6] sm:$0xff] %v874
    %891 = vst [vmem:[#allocation6 + $0x8] sm:$0xff] %v875
    %892 = vst [vmem:[#allocation6 + $0x10] sm:$0xff] %v876
    %893 = vst [vmem:[#allocation6 + $0x18] sm:$0xff] %v877
    %894 = vst [vmem:[#allocation6 + $0x20] sm:$0xff] %v878
    %895 = vst [vmem:[#allocation6 + $0x28] sm:$0xff] %v879
    %896 = vst [vmem:[#allocation6 + $0x30] sm:$0xff] %v880
    %897 = vst [vmem:[#allocation6 + $0x38] sm:$0xff] %v881
    %898 = vst [vmem:[#allocation6 + $0x40] sm:$0xff] %v882
    %899 = vst [vmem:[#allocation6 + $0x48] sm:$0xff] %v883
    %900 = vst [vmem:[#allocation6 + $0x50] sm:$0xff] %v884
    %901 = vst [vmem:[#allocation6 + $0x58] sm:$0xff] %v885
    %902 = vst [vmem:[#allocation6 + $0x60] sm:$0xff] %v886
    %903 = vst [vmem:[#allocation6 + $0x68] sm:$0xff] %v887
    %904 = vst [vmem:[#allocation6 + $0x70] sm:$0xff] %v888
    %905 = vst [vmem:[#allocation6 + $0x78] sm:$0xff] %v889
    // Predicated region
    $region26: #{tpu_custom_call.1} parent=1 // pred_check
      _
    $region27: #{tpu_custom_call.1} parent=1 // pred_check_branch
      %907 = sbr.rel (0) target = $region29
    $region28: #{tpu_custom_call.1} parent=1 // pred_region
      %s909 = ssub.s32 2048, 2048
      %910 = vsyncadd [#allocation5], %s909
      %s911 = sshll.u32 [#allocation6], 4
      %s912 = int_to_ptr.vmem [resolvable:$true] %s911
      %917 = dma.vmem_to_hbm [thread:$0]  %s912, 2048, %s5, [#allocation5], 256, 256, 16
    $region29: #{tpu_custom_call.1} parent=1 // pred_fallthru
      _
    // Predicated region
    $region30: #{tpu_custom_call.1} parent=1 // pred_check
      _
    $region31: #{tpu_custom_call.1} parent=1 // pred_check_branch
      %919 = sbr.rel (0) target = $region33
    $region32: #{tpu_custom_call.1} parent=1 // pred_region
      %920 = dma.done [#allocation5], 2048
    $region33: #{tpu_custom_call.1} parent=1 // pred_fallthru
      _
    %921 = vsyncpa [#allocation4], 1
    %922 = vsyncpa [#allocation5], 1

</llo_original>
